<compile_context>
chip_gen: v7x
topology: tpu7x:2x2x1
jax: 0.10.0
libtpu: 0.0.40
codegen_flags: <defaults>
</compile_context>

<pallas_src>
import jax
import jax.numpy as jnp
import numpy as np
from jax import lax
from jax.experimental import pallas as pl
from jax.experimental.pallas import tpu as pltpu


def _lstm_kernel(x_ref, wih_ref, whh_ref, b_ref, wout_ref, bout_ref,
                 out_ref,
                 xp_scr, hseq_scr):
    """Shapes:
      x_ref:    (S, B, 1)    time-major input (B already sublane-padded)
      wih_ref:  (1, 4H)      lane-packed input weights (input_size == 1), gate order i|f|g|o
      whh_ref:  (H, 4H)      lane-packed recurrent weights, W_hh^T (h @ W_cat)
      b_ref:    (1, 4H)      lane-packed bias (b_ih + b_hh)
      wout_ref: (1, H)       output Linear weight
      bout_ref: (1, 1)       output Linear bias
      out_ref:  (S, B)       per-timestep scalar prediction
      xp_scr:   (S, B, 4H)   precomputed lane-packed input projections (VMEM)
      hseq_scr: (S, B, H)    hidden-state history (VMEM)
    """
    S, B, _ = x_ref.shape
    H4 = whh_ref.shape[-1]
    H = H4 // 4

    # ---- hoisted input projection: x_t * w_ih + (b_ih + b_hh) for ALL steps ----
    # input_size == 1 -> one broadcast multiply into a single lane-dense (S,B,4H)
    # buffer; one unmasked bulk store instead of four lane-padded quarter buffers.
    x = x_ref[...]                                            # (S, B, 1)
    xp_scr[...] = x * wih_ref[...] + b_ref[...]               # (S, B, 4H)

    # Recurrent weights loaded once; loop-invariant, lane-packed (H, 4H).
    w_cat = whh_ref[...]

    def step(t, carry):
        h, c = carry                                          # (B, H), register-resident
        # One fused MXU push: (B, H) @ (H, 4H) -> (B, 4H) == one 128-lane vreg row.
        gates = xp_scr[t] + jnp.dot(h, w_cat,
                                    preferred_element_type=jnp.float32)
        sig = jax.nn.sigmoid(gates)                           # one full-vreg EUP pass
        i_g = sig[:, 0 * H:1 * H]                             # static lane slices (XLU)
        f_g = sig[:, 1 * H:2 * H]
        o_g = sig[:, 3 * H:4 * H]
        g_g = jnp.tanh(gates[:, 2 * H:3 * H])                 # tanh only on the g slice
        c_new = f_g * c + i_g * g_g
        h_new = o_g * jnp.tanh(c_new)
        hseq_scr[t] = h_new
        return h_new, c_new

    h0 = jnp.zeros((B, H), jnp.float32)
    c0 = jnp.zeros((B, H), jnp.float32)
    # Full unroll only for short sequences; partial unroll keeps MXU/EUP/VPU
    # overlap without blowing up vreg live ranges / compile time for long S.
    unroll = True if S <= 32 else 8
    lax.fori_loop(0, S, step, (h0, c0), unroll=unroll)

    # ---- hoisted output Linear (Dropout(p=0) is the identity) ----
    # One VPU multiply + lane reduce over the whole history; single bulk store.
    h_seq = hseq_scr[...]                                     # (S, B, H)
    y = jnp.sum(h_seq * wout_ref[...], axis=-1) + bout_ref[...]   # (S, B)
    out_ref[...] = y


def _padded_f32_bytes(shape):
    """VMEM footprint of an f32 array with (8, 128) tile padding of the last two dims."""
    shape = tuple(int(d) for d in shape)
    if len(shape) == 0:
        shape = (1, 1)
    elif len(shape) == 1:
        shape = (1, shape[0])
    lead = int(np.prod(shape[:-2], dtype=np.int64)) if len(shape) > 2 else 1
    sub = -(-shape[-2] // 8) * 8
    lanes = -(-shape[-1] // 128) * 128
    return 4 * lead * sub * lanes


def lstm_sine_forward(x, params):
    """x: (B, S, 1) float32, batch-first (PyTorch convention). Returns (B, S, 1)."""
    B, S, _ = x.shape
    H = params["w_hh"].shape[1]

    # Pad batch up to the sublane width (rows are independent through the LSTM).
    B_pad = max(8, -(-B // 8) * 8)

    x_tm = jnp.transpose(x, (1, 0, 2)).astype(jnp.float32)    # (S, B, 1)
    if B_pad != B:
        x_tm = jnp.pad(x_tm, ((0, 0), (0, B_pad - B), (0, 0)))

    # Lane-packed weight layout (PyTorch gate order along 4H: i, f, g, o).
    wih_row = params["w_ih"].reshape(1, 4 * H).astype(jnp.float32)          # (1, 4H)
    whh_cat = params["w_hh"].T.astype(jnp.float32)                          # (H, 4H) == W_hh^T
    bias_row = (params["b_ih"] + params["b_hh"]).reshape(1, 4 * H).astype(jnp.float32)
    wout = params["w_out"].reshape(1, H).astype(jnp.float32)
    bout = params["b_out"].reshape(1, 1).astype(jnp.float32)

    # Explicit VMEM budget from (8,128)-padded sizes (everything resident).
    # Capped at 64 MiB so the layout assumption stays valid on v7x.
    vmem_bytes = (
        _padded_f32_bytes(x_tm.shape)
        + _padded_f32_bytes(wih_row.shape)
        + _padded_f32_bytes(whh_cat.shape)
        + _padded_f32_bytes(bias_row.shape)
        + _padded_f32_bytes(wout.shape)
        + _padded_f32_bytes(bout.shape)
        + _padded_f32_bytes((S, B_pad))                # output
        + _padded_f32_bytes((S, B_pad, 4 * H))         # xp_scr
        + _padded_f32_bytes((S, B_pad, H))             # hseq_scr
    )
    vmem_limit = int(min(max(2 * vmem_bytes, 4 << 20), 64 << 20))

    out_tm = pl.pallas_call(
        _lstm_kernel,
        out_shape=jax.ShapeDtypeStruct((S, B_pad), jnp.float32),
        in_specs=[pl.BlockSpec(memory_space=pltpu.MemorySpace.VMEM)] * 6,
        out_specs=pl.BlockSpec(memory_space=pltpu.MemorySpace.VMEM),
        scratch_shapes=[
            pltpu.VMEM((S, B_pad, 4 * H), jnp.float32),   # lane-packed x-proj (i|f|g|o)
            pltpu.VMEM((S, B_pad, H), jnp.float32),       # hidden-state history
        ],
        compiler_params=pltpu.CompilerParams(vmem_limit_bytes=vmem_limit),
    )(x_tm, wih_row, whh_cat, bias_row, wout, bout)

    # (S, B_pad) -> (B, S, 1)
    return jnp.transpose(out_tm[:, :B], (1, 0))[..., None]


def _reference_forward(x, params):
    """Pure-JAX reference mirroring torch.nn.LSTM(1, H) + Linear(H, 1)."""
    H = params["w_hh"].shape[1]
    wih_row = params["w_ih"].reshape(4 * H)       # input_size == 1
    whh = params["w_hh"]
    b = params["b_ih"] + params["b_hh"]
    wout = params["w_out"].reshape(H)
    bout = params["b_out"]

    def cell(carry, x_t):                          # x_t: (B, 1)
        h, c = carry
        gates = x_t * wih_row + jnp.dot(h, whh.T) + b
        i_g = jax.nn.sigmoid(gates[:, 0 * H:1 * H])
        f_g = jax.nn.sigmoid(gates[:, 1 * H:2 * H])
        g_g = jnp.tanh(gates[:, 2 * H:3 * H])
        o_g = jax.nn.sigmoid(gates[:, 3 * H:4 * H])
        c_new = f_g * c + i_g * g_g
        h_new = o_g * jnp.tanh(c_new)
        return (h_new, c_new), h_new

    B = x.shape[0]
    x_tm = jnp.transpose(x, (1, 0, 2))                         # (S, B, 1)
    init = (jnp.zeros((B, H), jnp.float32), jnp.zeros((B, H), jnp.float32))
    _, h_seq = lax.scan(cell, init, x_tm)                      # (S, B, H)
    y = jnp.sum(h_seq * wout, axis=-1, keepdims=True) + bout   # (S, B, 1)
    return jnp.transpose(y, (1, 0, 2))


def init_params(key, hidden):
    """Deterministic synthetic parameters matching nn.LSTM(1, hidden) + Linear(hidden, 1)."""
    H = hidden
    k = 1.0 / np.sqrt(H)
    keys = jax.random.split(key, 6)
    u = lambda kk, shape: jax.random.uniform(kk, shape, jnp.float32, -k, k)
    return {
        "w_ih": u(keys[0], (4 * H, 1)),    # weight_ih_l0
        "w_hh": u(keys[1], (4 * H, H)),    # weight_hh_l0
        "b_ih": u(keys[2], (4 * H,)),      # bias_ih_l0
        "b_hh": u(keys[3], (4 * H,)),      # bias_hh_l0
        "w_out": u(keys[4], (1, H)),       # output.weight
        "b_out": u(keys[5], (1,)),         # output.bias
    }


if __name__ == "__main__":
    B, S, H = 2, 8, 32

    key = jax.random.PRNGKey(0)
    pkey, xkey = jax.random.split(key)
    params = init_params(pkey, H)

    # Sine-like toy input, shape (batch, seq, 1) == LSTM batch_first input.
    t = jnp.arange(S, dtype=jnp.float32)
    phase = jax.random.uniform(xkey, (B, 1), jnp.float32, 0.0, 2.0 * np.pi)
    x = jnp.sin(t[None, :] * 0.3 + phase)[..., None]           # (B, S, 1)

    y = jax.block_until_ready(lstm_sine_forward(x, params))
    y_ref = jax.block_until_ready(_reference_forward(x, params))

    assert y.shape == (B, S, 1)
    np.testing.assert_allclose(np.asarray(y), np.asarray(y_ref),
                               rtol=1e-5, atol=1e-5)
    print("KERNEL_OK")
</pallas_src>

<mosaic_0001>
module attributes {stable_mosaic.version = 11 : i64} {
  func.func @_lstm_kernel(%arg0: memref<8x8x1xf32, #tpu.memory_space<vmem>>, %arg1: memref<1x128xf32, #tpu.memory_space<vmem>>, %arg2: memref<32x128xf32, #tpu.memory_space<vmem>>, %arg3: memref<1x128xf32, #tpu.memory_space<vmem>>, %arg4: memref<1x32xf32, #tpu.memory_space<vmem>>, %arg5: memref<1x1xf32, #tpu.memory_space<vmem>>, %arg6: memref<8x8xf32, #tpu.memory_space<vmem>>, %arg7: memref<8x8x128xf32, #tpu.memory_space<vmem>>, %arg8: memref<8x8x32xf32, #tpu.memory_space<vmem>>) attributes {dimension_semantics = [], scalar_prefetch = 0 : i64, scratch_operands = 2 : i64, tpu.core_type = #tpu.core_type<tc>} {
    %c0 = arith.constant 0 : index
    %c0_0 = arith.constant 0 : index
    %c0_1 = arith.constant 0 : index
    %0 = vector.load %arg0[%c0, %c0_0, %c0_1] : memref<8x8x1xf32, #tpu.memory_space<vmem>>, vector<8x8x1xf32>
    %c0_2 = arith.constant 0 : index
    %c0_3 = arith.constant 0 : index
    %1 = vector.load %arg1[%c0_2, %c0_3] : memref<1x128xf32, #tpu.memory_space<vmem>>, vector<1x128xf32>
    %2 = vector.shape_cast %1 : vector<1x128xf32> to vector<1x1x128xf32>
    %3 = vector.broadcast %0 : vector<8x8x1xf32> to vector<8x8x128xf32>
    %4 = vector.broadcast %2 : vector<1x1x128xf32> to vector<8x8x128xf32>
    %5 = arith.mulf %3, %4 : vector<8x8x128xf32>
    %c0_4 = arith.constant 0 : index
    %c0_5 = arith.constant 0 : index
    %6 = vector.load %arg3[%c0_4, %c0_5] : memref<1x128xf32, #tpu.memory_space<vmem>>, vector<1x128xf32>
    %7 = vector.shape_cast %6 : vector<1x128xf32> to vector<1x1x128xf32>
    %8 = vector.broadcast %7 : vector<1x1x128xf32> to vector<8x8x128xf32>
    %9 = arith.addf %5, %8 : vector<8x8x128xf32>
    %c0_6 = arith.constant 0 : index
    %c0_7 = arith.constant 0 : index
    %c0_8 = arith.constant 0 : index
    %10 = vector.load %arg7[%c0_6, %c0_7, %c0_8] : memref<8x8x128xf32, #tpu.memory_space<vmem>>, vector<8x8x128xf32>
    tpu.vector_store %arg7[%c0_6, %c0_7, %c0_8], %9 {strides = array<i32>} : memref<8x8x128xf32, #tpu.memory_space<vmem>>, vector<8x8x128xf32>,
    %c0_9 = arith.constant 0 : index
    %c0_10 = arith.constant 0 : index
    %11 = vector.load %arg2[%c0_9, %c0_10] : memref<32x128xf32, #tpu.memory_space<vmem>>, vector<32x128xf32>
    %cst = arith.constant 0.000000e+00 : f32
    %12 = vector.broadcast %cst : f32 to vector<8x32xf32>
    %cst_11 = arith.constant 0.000000e+00 : f32
    %13 = vector.broadcast %cst_11 : f32 to vector<8x32xf32>
    %c0_i32 = arith.constant 0 : i32
    %14 = arith.index_cast %c0_i32 : i32 to index
    %c0_12 = arith.constant 0 : index
    %c0_13 = arith.constant 0 : index
    %15 = vector.load %arg7[%14, %c0_12, %c0_13] : memref<8x8x128xf32, #tpu.memory_space<vmem>>, vector<1x8x128xf32>
    %16 = vector.shape_cast %15 : vector<1x8x128xf32> to vector<8x128xf32>
    %cst_14 = arith.constant dense<0.000000e+00> : vector<8x128xf32>
    %17 = tpu.matmul %12, %11, %cst_14 {dimension_numbers = #tpu.dot_dimension_numbers<[1], [0], [0], [1], [0, 0, 1, 1], [], []>} : vector<8x32xf32>, vector<32x128xf32>, vector<8x128xf32> -> vector<8x128xf32>
    %18 = arith.addf %16, %17 : vector<8x128xf32>
    %19 = arith.negf %18 : vector<8x128xf32>
    %20 = math.exp %19 : vector<8x128xf32>
    %cst_15 = arith.constant 1.000000e+00 : f32
    %21 = vector.broadcast %cst_15 : f32 to vector<8x128xf32>
    %22 = arith.addf %21, %20 : vector<8x128xf32>
    %23 = arith.divf %21, %22 : vector<8x128xf32>
    %24 = vector.extract_strided_slice %23 {offsets = [0, 0], sizes = [8, 32], strides = [1, 1]} : vector<8x128xf32> to vector<8x32xf32>
    %25 = vector.extract_strided_slice %23 {offsets = [0, 32], sizes = [8, 32], strides = [1, 1]} : vector<8x128xf32> to vector<8x32xf32>
    %26 = vector.extract_strided_slice %23 {offsets = [0, 96], sizes = [8, 32], strides = [1, 1]} : vector<8x128xf32> to vector<8x32xf32>
    %27 = vector.extract_strided_slice %18 {offsets = [0, 64], sizes = [8, 32], strides = [1, 1]} : vector<8x128xf32> to vector<8x32xf32>
    %28 = math.tanh %27 : vector<8x32xf32>
    %29 = arith.mulf %25, %13 : vector<8x32xf32>
    %30 = arith.mulf %24, %28 : vector<8x32xf32>
    %31 = arith.addf %29, %30 : vector<8x32xf32>
    %32 = math.tanh %31 : vector<8x32xf32>
    %33 = arith.mulf %26, %32 : vector<8x32xf32>
    %34 = arith.index_cast %c0_i32 : i32 to index
    %c0_16 = arith.constant 0 : index
    %c0_17 = arith.constant 0 : index
    %35 = vector.load %arg8[%34, %c0_16, %c0_17] : memref<8x8x32xf32, #tpu.memory_space<vmem>>, vector<1x8x32xf32>
    %36 = vector.shape_cast %35 : vector<1x8x32xf32> to vector<8x32xf32>
    %37 = vector.shape_cast %33 : vector<8x32xf32> to vector<1x8x32xf32>
    tpu.vector_store %arg8[%34, %c0_16, %c0_17], %37 {strides = array<i32>} : memref<8x8x32xf32, #tpu.memory_space<vmem>>, vector<1x8x32xf32>,
    %c1_i32 = arith.constant 1 : i32
    %38 = arith.index_cast %c1_i32 : i32 to index
    %c0_18 = arith.constant 0 : index
    %c0_19 = arith.constant 0 : index
    %39 = vector.load %arg7[%38, %c0_18, %c0_19] : memref<8x8x128xf32, #tpu.memory_space<vmem>>, vector<1x8x128xf32>
    %40 = vector.shape_cast %39 : vector<1x8x128xf32> to vector<8x128xf32>
    %cst_20 = arith.constant dense<0.000000e+00> : vector<8x128xf32>
    %41 = tpu.matmul %33, %11, %cst_20 {dimension_numbers = #tpu.dot_dimension_numbers<[1], [0], [0], [1], [0, 0, 1, 1], [], []>} : vector<8x32xf32>, vector<32x128xf32>, vector<8x128xf32> -> vector<8x128xf32>
    %42 = arith.addf %40, %41 : vector<8x128xf32>
    %43 = arith.negf %42 : vector<8x128xf32>
    %44 = math.exp %43 : vector<8x128xf32>
    %cst_21 = arith.constant 1.000000e+00 : f32
    %45 = vector.broadcast %cst_21 : f32 to vector<8x128xf32>
    %46 = arith.addf %45, %44 : vector<8x128xf32>
    %47 = arith.divf %45, %46 : vector<8x128xf32>
    %48 = vector.extract_strided_slice %47 {offsets = [0, 0], sizes = [8, 32], strides = [1, 1]} : vector<8x128xf32> to vector<8x32xf32>
    %49 = vector.extract_strided_slice %47 {offsets = [0, 32], sizes = [8, 32], strides = [1, 1]} : vector<8x128xf32> to vector<8x32xf32>
    %50 = vector.extract_strided_slice %47 {offsets = [0, 96], sizes = [8, 32], strides = [1, 1]} : vector<8x128xf32> to vector<8x32xf32>
    %51 = vector.extract_strided_slice %42 {offsets = [0, 64], sizes = [8, 32], strides = [1, 1]} : vector<8x128xf32> to vector<8x32xf32>
    %52 = math.tanh %51 : vector<8x32xf32>
    %53 = arith.mulf %49, %31 : vector<8x32xf32>
    %54 = arith.mulf %48, %52 : vector<8x32xf32>
    %55 = arith.addf %53, %54 : vector<8x32xf32>
    %56 = math.tanh %55 : vector<8x32xf32>
    %57 = arith.mulf %50, %56 : vector<8x32xf32>
    %58 = arith.index_cast %c1_i32 : i32 to index
    %c0_22 = arith.constant 0 : index
    %c0_23 = arith.constant 0 : index
    %59 = vector.load %arg8[%58, %c0_22, %c0_23] : memref<8x8x32xf32, #tpu.memory_space<vmem>>, vector<1x8x32xf32>
    %60 = vector.shape_cast %59 : vector<1x8x32xf32> to vector<8x32xf32>
    %61 = vector.shape_cast %57 : vector<8x32xf32> to vector<1x8x32xf32>
    tpu.vector_store %arg8[%58, %c0_22, %c0_23], %61 {strides = array<i32>} : memref<8x8x32xf32, #tpu.memory_space<vmem>>, vector<1x8x32xf32>,
    %c2_i32 = arith.constant 2 : i32
    %62 = arith.index_cast %c2_i32 : i32 to index
    %c0_24 = arith.constant 0 : index
    %c0_25 = arith.constant 0 : index
    %63 = vector.load %arg7[%62, %c0_24, %c0_25] : memref<8x8x128xf32, #tpu.memory_space<vmem>>, vector<1x8x128xf32>
    %64 = vector.shape_cast %63 : vector<1x8x128xf32> to vector<8x128xf32>
    %cst_26 = arith.constant dense<0.000000e+00> : vector<8x128xf32>
    %65 = tpu.matmul %57, %11, %cst_26 {dimension_numbers = #tpu.dot_dimension_numbers<[1], [0], [0], [1], [0, 0, 1, 1], [], []>} : vector<8x32xf32>, vector<32x128xf32>, vector<8x128xf32> -> vector<8x128xf32>
    %66 = arith.addf %64, %65 : vector<8x128xf32>
    %67 = arith.negf %66 : vector<8x128xf32>
    %68 = math.exp %67 : vector<8x128xf32>
    %cst_27 = arith.constant 1.000000e+00 : f32
    %69 = vector.broadcast %cst_27 : f32 to vector<8x128xf32>
    %70 = arith.addf %69, %68 : vector<8x128xf32>
    %71 = arith.divf %69, %70 : vector<8x128xf32>
    %72 = vector.extract_strided_slice %71 {offsets = [0, 0], sizes = [8, 32], strides = [1, 1]} : vector<8x128xf32> to vector<8x32xf32>
    %73 = vector.extract_strided_slice %71 {offsets = [0, 32], sizes = [8, 32], strides = [1, 1]} : vector<8x128xf32> to vector<8x32xf32>
    %74 = vector.extract_strided_slice %71 {offsets = [0, 96], sizes = [8, 32], strides = [1, 1]} : vector<8x128xf32> to vector<8x32xf32>
    %75 = vector.extract_strided_slice %66 {offsets = [0, 64], sizes = [8, 32], strides = [1, 1]} : vector<8x128xf32> to vector<8x32xf32>
    %76 = math.tanh %75 : vector<8x32xf32>
    %77 = arith.mulf %73, %55 : vector<8x32xf32>
    %78 = arith.mulf %72, %76 : vector<8x32xf32>
    %79 = arith.addf %77, %78 : vector<8x32xf32>
    %80 = math.tanh %79 : vector<8x32xf32>
    %81 = arith.mulf %74, %80 : vector<8x32xf32>
    %82 = arith.index_cast %c2_i32 : i32 to index
    %c0_28 = arith.constant 0 : index
    %c0_29 = arith.constant 0 : index
    %83 = vector.load %arg8[%82, %c0_28, %c0_29] : memref<8x8x32xf32, #tpu.memory_space<vmem>>, vector<1x8x32xf32>
    %84 = vector.shape_cast %83 : vector<1x8x32xf32> to vector<8x32xf32>
    %85 = vector.shape_cast %81 : vector<8x32xf32> to vector<1x8x32xf32>
    tpu.vector_store %arg8[%82, %c0_28, %c0_29], %85 {strides = array<i32>} : memref<8x8x32xf32, #tpu.memory_space<vmem>>, vector<1x8x32xf32>,
    %c3_i32 = arith.constant 3 : i32
    %86 = arith.index_cast %c3_i32 : i32 to index
    %c0_30 = arith.constant 0 : index
    %c0_31 = arith.constant 0 : index
    %87 = vector.load %arg7[%86, %c0_30, %c0_31] : memref<8x8x128xf32, #tpu.memory_space<vmem>>, vector<1x8x128xf32>
    %88 = vector.shape_cast %87 : vector<1x8x128xf32> to vector<8x128xf32>
    %cst_32 = arith.constant dense<0.000000e+00> : vector<8x128xf32>
    %89 = tpu.matmul %81, %11, %cst_32 {dimension_numbers = #tpu.dot_dimension_numbers<[1], [0], [0], [1], [0, 0, 1, 1], [], []>} : vector<8x32xf32>, vector<32x128xf32>, vector<8x128xf32> -> vector<8x128xf32>
    %90 = arith.addf %88, %89 : vector<8x128xf32>
    %91 = arith.negf %90 : vector<8x128xf32>
    %92 = math.exp %91 : vector<8x128xf32>
    %cst_33 = arith.constant 1.000000e+00 : f32
    %93 = vector.broadcast %cst_33 : f32 to vector<8x128xf32>
    %94 = arith.addf %93, %92 : vector<8x128xf32>
    %95 = arith.divf %93, %94 : vector<8x128xf32>
    %96 = vector.extract_strided_slice %95 {offsets = [0, 0], sizes = [8, 32], strides = [1, 1]} : vector<8x128xf32> to vector<8x32xf32>
    %97 = vector.extract_strided_slice %95 {offsets = [0, 32], sizes = [8, 32], strides = [1, 1]} : vector<8x128xf32> to vector<8x32xf32>
    %98 = vector.extract_strided_slice %95 {offsets = [0, 96], sizes = [8, 32], strides = [1, 1]} : vector<8x128xf32> to vector<8x32xf32>
    %99 = vector.extract_strided_slice %90 {offsets = [0, 64], sizes = [8, 32], strides = [1, 1]} : vector<8x128xf32> to vector<8x32xf32>
    %100 = math.tanh %99 : vector<8x32xf32>
    %101 = arith.mulf %97, %79 : vector<8x32xf32>
    %102 = arith.mulf %96, %100 : vector<8x32xf32>
    %103 = arith.addf %101, %102 : vector<8x32xf32>
    %104 = math.tanh %103 : vector<8x32xf32>
    %105 = arith.mulf %98, %104 : vector<8x32xf32>
    %106 = arith.index_cast %c3_i32 : i32 to index
    %c0_34 = arith.constant 0 : index
    %c0_35 = arith.constant 0 : index
    %107 = vector.load %arg8[%106, %c0_34, %c0_35] : memref<8x8x32xf32, #tpu.memory_space<vmem>>, vector<1x8x32xf32>
    %108 = vector.shape_cast %107 : vector<1x8x32xf32> to vector<8x32xf32>
    %109 = vector.shape_cast %105 : vector<8x32xf32> to vector<1x8x32xf32>
    tpu.vector_store %arg8[%106, %c0_34, %c0_35], %109 {strides = array<i32>} : memref<8x8x32xf32, #tpu.memory_space<vmem>>, vector<1x8x32xf32>,
    %c4_i32 = arith.constant 4 : i32
    %110 = arith.index_cast %c4_i32 : i32 to index
    %c0_36 = arith.constant 0 : index
    %c0_37 = arith.constant 0 : index
    %111 = vector.load %arg7[%110, %c0_36, %c0_37] : memref<8x8x128xf32, #tpu.memory_space<vmem>>, vector<1x8x128xf32>
    %112 = vector.shape_cast %111 : vector<1x8x128xf32> to vector<8x128xf32>
    %cst_38 = arith.constant dense<0.000000e+00> : vector<8x128xf32>
    %113 = tpu.matmul %105, %11, %cst_38 {dimension_numbers = #tpu.dot_dimension_numbers<[1], [0], [0], [1], [0, 0, 1, 1], [], []>} : vector<8x32xf32>, vector<32x128xf32>, vector<8x128xf32> -> vector<8x128xf32>
    %114 = arith.addf %112, %113 : vector<8x128xf32>
    %115 = arith.negf %114 : vector<8x128xf32>
    %116 = math.exp %115 : vector<8x128xf32>
    %cst_39 = arith.constant 1.000000e+00 : f32
    %117 = vector.broadcast %cst_39 : f32 to vector<8x128xf32>
    %118 = arith.addf %117, %116 : vector<8x128xf32>
    %119 = arith.divf %117, %118 : vector<8x128xf32>
    %120 = vector.extract_strided_slice %119 {offsets = [0, 0], sizes = [8, 32], strides = [1, 1]} : vector<8x128xf32> to vector<8x32xf32>
    %121 = vector.extract_strided_slice %119 {offsets = [0, 32], sizes = [8, 32], strides = [1, 1]} : vector<8x128xf32> to vector<8x32xf32>
    %122 = vector.extract_strided_slice %119 {offsets = [0, 96], sizes = [8, 32], strides = [1, 1]} : vector<8x128xf32> to vector<8x32xf32>
    %123 = vector.extract_strided_slice %114 {offsets = [0, 64], sizes = [8, 32], strides = [1, 1]} : vector<8x128xf32> to vector<8x32xf32>
    %124 = math.tanh %123 : vector<8x32xf32>
    %125 = arith.mulf %121, %103 : vector<8x32xf32>
    %126 = arith.mulf %120, %124 : vector<8x32xf32>
    %127 = arith.addf %125, %126 : vector<8x32xf32>
    %128 = math.tanh %127 : vector<8x32xf32>
    %129 = arith.mulf %122, %128 : vector<8x32xf32>
    %130 = arith.index_cast %c4_i32 : i32 to index
    %c0_40 = arith.constant 0 : index
    %c0_41 = arith.constant 0 : index
    %131 = vector.load %arg8[%130, %c0_40, %c0_41] : memref<8x8x32xf32, #tpu.memory_space<vmem>>, vector<1x8x32xf32>
    %132 = vector.shape_cast %131 : vector<1x8x32xf32> to vector<8x32xf32>
    %133 = vector.shape_cast %129 : vector<8x32xf32> to vector<1x8x32xf32>
    tpu.vector_store %arg8[%130, %c0_40, %c0_41], %133 {strides = array<i32>} : memref<8x8x32xf32, #tpu.memory_space<vmem>>, vector<1x8x32xf32>,
    %c5_i32 = arith.constant 5 : i32
    %134 = arith.index_cast %c5_i32 : i32 to index
    %c0_42 = arith.constant 0 : index
    %c0_43 = arith.constant 0 : index
    %135 = vector.load %arg7[%134, %c0_42, %c0_43] : memref<8x8x128xf32, #tpu.memory_space<vmem>>, vector<1x8x128xf32>
    %136 = vector.shape_cast %135 : vector<1x8x128xf32> to vector<8x128xf32>
    %cst_44 = arith.constant dense<0.000000e+00> : vector<8x128xf32>
    %137 = tpu.matmul %129, %11, %cst_44 {dimension_numbers = #tpu.dot_dimension_numbers<[1], [0], [0], [1], [0, 0, 1, 1], [], []>} : vector<8x32xf32>, vector<32x128xf32>, vector<8x128xf32> -> vector<8x128xf32>
    %138 = arith.addf %136, %137 : vector<8x128xf32>
    %139 = arith.negf %138 : vector<8x128xf32>
    %140 = math.exp %139 : vector<8x128xf32>
    %cst_45 = arith.constant 1.000000e+00 : f32
    %141 = vector.broadcast %cst_45 : f32 to vector<8x128xf32>
    %142 = arith.addf %141, %140 : vector<8x128xf32>
    %143 = arith.divf %141, %142 : vector<8x128xf32>
    %144 = vector.extract_strided_slice %143 {offsets = [0, 0], sizes = [8, 32], strides = [1, 1]} : vector<8x128xf32> to vector<8x32xf32>
    %145 = vector.extract_strided_slice %143 {offsets = [0, 32], sizes = [8, 32], strides = [1, 1]} : vector<8x128xf32> to vector<8x32xf32>
    %146 = vector.extract_strided_slice %143 {offsets = [0, 96], sizes = [8, 32], strides = [1, 1]} : vector<8x128xf32> to vector<8x32xf32>
    %147 = vector.extract_strided_slice %138 {offsets = [0, 64], sizes = [8, 32], strides = [1, 1]} : vector<8x128xf32> to vector<8x32xf32>
    %148 = math.tanh %147 : vector<8x32xf32>
    %149 = arith.mulf %145, %127 : vector<8x32xf32>
    %150 = arith.mulf %144, %148 : vector<8x32xf32>
    %151 = arith.addf %149, %150 : vector<8x32xf32>
    %152 = math.tanh %151 : vector<8x32xf32>
    %153 = arith.mulf %146, %152 : vector<8x32xf32>
    %154 = arith.index_cast %c5_i32 : i32 to index
    %c0_46 = arith.constant 0 : index
    %c0_47 = arith.constant 0 : index
    %155 = vector.load %arg8[%154, %c0_46, %c0_47] : memref<8x8x32xf32, #tpu.memory_space<vmem>>, vector<1x8x32xf32>
    %156 = vector.shape_cast %155 : vector<1x8x32xf32> to vector<8x32xf32>
    %157 = vector.shape_cast %153 : vector<8x32xf32> to vector<1x8x32xf32>
    tpu.vector_store %arg8[%154, %c0_46, %c0_47], %157 {strides = array<i32>} : memref<8x8x32xf32, #tpu.memory_space<vmem>>, vector<1x8x32xf32>,
    %c6_i32 = arith.constant 6 : i32
    %158 = arith.index_cast %c6_i32 : i32 to index
    %c0_48 = arith.constant 0 : index
    %c0_49 = arith.constant 0 : index
    %159 = vector.load %arg7[%158, %c0_48, %c0_49] : memref<8x8x128xf32, #tpu.memory_space<vmem>>, vector<1x8x128xf32>
    %160 = vector.shape_cast %159 : vector<1x8x128xf32> to vector<8x128xf32>
    %cst_50 = arith.constant dense<0.000000e+00> : vector<8x128xf32>
    %161 = tpu.matmul %153, %11, %cst_50 {dimension_numbers = #tpu.dot_dimension_numbers<[1], [0], [0], [1], [0, 0, 1, 1], [], []>} : vector<8x32xf32>, vector<32x128xf32>, vector<8x128xf32> -> vector<8x128xf32>
    %162 = arith.addf %160, %161 : vector<8x128xf32>
    %163 = arith.negf %162 : vector<8x128xf32>
    %164 = math.exp %163 : vector<8x128xf32>
    %cst_51 = arith.constant 1.000000e+00 : f32
    %165 = vector.broadcast %cst_51 : f32 to vector<8x128xf32>
    %166 = arith.addf %165, %164 : vector<8x128xf32>
    %167 = arith.divf %165, %166 : vector<8x128xf32>
    %168 = vector.extract_strided_slice %167 {offsets = [0, 0], sizes = [8, 32], strides = [1, 1]} : vector<8x128xf32> to vector<8x32xf32>
    %169 = vector.extract_strided_slice %167 {offsets = [0, 32], sizes = [8, 32], strides = [1, 1]} : vector<8x128xf32> to vector<8x32xf32>
    %170 = vector.extract_strided_slice %167 {offsets = [0, 96], sizes = [8, 32], strides = [1, 1]} : vector<8x128xf32> to vector<8x32xf32>
    %171 = vector.extract_strided_slice %162 {offsets = [0, 64], sizes = [8, 32], strides = [1, 1]} : vector<8x128xf32> to vector<8x32xf32>
    %172 = math.tanh %171 : vector<8x32xf32>
    %173 = arith.mulf %169, %151 : vector<8x32xf32>
    %174 = arith.mulf %168, %172 : vector<8x32xf32>
    %175 = arith.addf %173, %174 : vector<8x32xf32>
    %176 = math.tanh %175 : vector<8x32xf32>
    %177 = arith.mulf %170, %176 : vector<8x32xf32>
    %178 = arith.index_cast %c6_i32 : i32 to index
    %c0_52 = arith.constant 0 : index
    %c0_53 = arith.constant 0 : index
    %179 = vector.load %arg8[%178, %c0_52, %c0_53] : memref<8x8x32xf32, #tpu.memory_space<vmem>>, vector<1x8x32xf32>
    %180 = vector.shape_cast %179 : vector<1x8x32xf32> to vector<8x32xf32>
    %181 = vector.shape_cast %177 : vector<8x32xf32> to vector<1x8x32xf32>
    tpu.vector_store %arg8[%178, %c0_52, %c0_53], %181 {strides = array<i32>} : memref<8x8x32xf32, #tpu.memory_space<vmem>>, vector<1x8x32xf32>,
    %c7_i32 = arith.constant 7 : i32
    %182 = arith.index_cast %c7_i32 : i32 to index
    %c0_54 = arith.constant 0 : index
    %c0_55 = arith.constant 0 : index
    %183 = vector.load %arg7[%182, %c0_54, %c0_55] : memref<8x8x128xf32, #tpu.memory_space<vmem>>, vector<1x8x128xf32>
    %184 = vector.shape_cast %183 : vector<1x8x128xf32> to vector<8x128xf32>
    %cst_56 = arith.constant dense<0.000000e+00> : vector<8x128xf32>
    %185 = tpu.matmul %177, %11, %cst_56 {dimension_numbers = #tpu.dot_dimension_numbers<[1], [0], [0], [1], [0, 0, 1, 1], [], []>} : vector<8x32xf32>, vector<32x128xf32>, vector<8x128xf32> -> vector<8x128xf32>
    %186 = arith.addf %184, %185 : vector<8x128xf32>
    %187 = arith.negf %186 : vector<8x128xf32>
    %188 = math.exp %187 : vector<8x128xf32>
    %cst_57 = arith.constant 1.000000e+00 : f32
    %189 = vector.broadcast %cst_57 : f32 to vector<8x128xf32>
    %190 = arith.addf %189, %188 : vector<8x128xf32>
    %191 = arith.divf %189, %190 : vector<8x128xf32>
    %192 = vector.extract_strided_slice %191 {offsets = [0, 0], sizes = [8, 32], strides = [1, 1]} : vector<8x128xf32> to vector<8x32xf32>
    %193 = vector.extract_strided_slice %191 {offsets = [0, 32], sizes = [8, 32], strides = [1, 1]} : vector<8x128xf32> to vector<8x32xf32>
    %194 = vector.extract_strided_slice %191 {offsets = [0, 96], sizes = [8, 32], strides = [1, 1]} : vector<8x128xf32> to vector<8x32xf32>
    %195 = vector.extract_strided_slice %186 {offsets = [0, 64], sizes = [8, 32], strides = [1, 1]} : vector<8x128xf32> to vector<8x32xf32>
    %196 = math.tanh %195 : vector<8x32xf32>
    %197 = arith.mulf %193, %175 : vector<8x32xf32>
    %198 = arith.mulf %192, %196 : vector<8x32xf32>
    %199 = arith.addf %197, %198 : vector<8x32xf32>
    %200 = math.tanh %199 : vector<8x32xf32>
    %201 = arith.mulf %194, %200 : vector<8x32xf32>
    %202 = arith.index_cast %c7_i32 : i32 to index
    %c0_58 = arith.constant 0 : index
    %c0_59 = arith.constant 0 : index
    %203 = vector.load %arg8[%202, %c0_58, %c0_59] : memref<8x8x32xf32, #tpu.memory_space<vmem>>, vector<1x8x32xf32>
    %204 = vector.shape_cast %203 : vector<1x8x32xf32> to vector<8x32xf32>
    %205 = vector.shape_cast %201 : vector<8x32xf32> to vector<1x8x32xf32>
    tpu.vector_store %arg8[%202, %c0_58, %c0_59], %205 {strides = array<i32>} : memref<8x8x32xf32, #tpu.memory_space<vmem>>, vector<1x8x32xf32>,
    %c8_i32 = arith.constant 8 : i32
    %c0_60 = arith.constant 0 : index
    %c0_61 = arith.constant 0 : index
    %c0_62 = arith.constant 0 : index
    %206 = vector.load %arg8[%c0_60, %c0_61, %c0_62] : memref<8x8x32xf32, #tpu.memory_space<vmem>>, vector<8x8x32xf32>
    %c0_63 = arith.constant 0 : index
    %c0_64 = arith.constant 0 : index
    %207 = vector.load %arg4[%c0_63, %c0_64] : memref<1x32xf32, #tpu.memory_space<vmem>>, vector<1x32xf32>
    %208 = vector.shape_cast %207 : vector<1x32xf32> to vector<1x1x32xf32>
    %209 = vector.broadcast %208 : vector<1x1x32xf32> to vector<8x8x32xf32>
    %210 = arith.mulf %206, %209 : vector<8x8x32xf32>
    %cst_65 = arith.constant dense<0.000000e+00> : vector<8x8xf32>
    %211 = vector.multi_reduction <add>, %210, %cst_65 [2] : vector<8x8x32xf32> to vector<8x8xf32>
    %c0_66 = arith.constant 0 : index
    %c0_67 = arith.constant 0 : index
    %212 = vector.load %arg5[%c0_66, %c0_67] : memref<1x1xf32, #tpu.memory_space<vmem>>, vector<1x1xf32>
    %213 = vector.broadcast %212 : vector<1x1xf32> to vector<8x8xf32>
    %214 = arith.addf %211, %213 : vector<8x8xf32>
    %c0_68 = arith.constant 0 : index
    %c0_69 = arith.constant 0 : index
    %215 = vector.load %arg6[%c0_68, %c0_69] : memref<8x8xf32, #tpu.memory_space<vmem>>, vector<8x8xf32>
    tpu.vector_store %arg6[%c0_68, %c0_69], %214 {strides = array<i32>} : memref<8x8xf32, #tpu.memory_space<vmem>>, vector<8x8xf32>,
    return
  }
}

</mosaic_0001>

<llo_original>
// kernel: tpu_custom_call.1
$region0: #{tpu_custom_call.1}
  #allocation0 [shape = 'u32[]', space=smem, size = 0x4, offset = 0x4, fixed_abs, tag = 'smem constant byte address 0x4 - core index']
  #allocation1 [shape = 'u32[144,128]{1,0:T(1,128)}', space=vmem, size = 0x12000, scoped, tag = 'internal scratch']
  #allocation2 [shape = 'f32[8,8,128]{2,1,0:T(8,128)}', space=vmem, size = 0x8000, scoped, tag = 'scratch operand']
  #allocation3 [shape = 'f32[8,8,32]{2,1,0:T(8,128)}', space=vmem, size = 0x8000, scoped, tag = 'scratch operand']
  #allocation4 [shape = 'f32[1,1]{1,0:T(1,128)S(1)}', space=vmem, size = 0x200, scoped, tag = 'scoped memory for tpu_custom_call.1']
  %s0 = inlined_call_operand.vmem [shape: f32[8,8,1], index: 0, kind: input, shape index: {}]
  %s1 = inlined_call_operand.vmem [shape: f32[1,128], index: 1, kind: input, shape index: {}]
  %s2 = inlined_call_operand.vmem [shape: f32[32,128], index: 2, kind: input, shape index: {}]
  %s3 = inlined_call_operand.vmem [shape: f32[1,128], index: 3, kind: input, shape index: {}]
  %s4 = inlined_call_operand.vmem [shape: f32[1,32], index: 4, kind: input, shape index: {}]
  %s5 = inlined_call_operand.<no memory space> [shape: f32[1,1], index: 5, kind: input, shape index: {}]
  %s6 = inlined_call_operand.hbm [shape: f32[8,8], index: 6, kind: output, shape index: {}]
  %s7 = sld [smem:[#allocation0]]
  $region34: #{tpu_custom_call.1} parent=0
    _
  %s9 = ssub.s32 1, %s7
  %s10 = scalar_select 0, %s9, %s7
  %v11 = vstv %s5
  %12 = vst [vmem:[#allocation4] sm:$0x1] %v11
  $region1: #{tpu_custom_call.1} parent=0
    #allocation5 [shape = 'u8[4096]{0}', space=vmem, size = 0x1000, scoped, tag = 'output window, operand 0, single buffered']
    #allocation6 [shape = 's32[1]{0}', space=sflag, size = 0x4, scoped, tag = 'scoped memory for tpu_custom_call.1']
    %13 = vsyncpa [#allocation6], 0
    // Predicated region
    $region2: #{tpu_custom_call.1} parent=1 // pred_check
      _
    $region3: #{tpu_custom_call.1} parent=1 // pred_check_branch
      %15 = sbr.rel (0) target = $region5
    $region4: #{tpu_custom_call.1} parent=1 // pred_region
      _
    $region5: #{tpu_custom_call.1} parent=1 // pred_fallthru
      _
    // Predicated region
    $region6: #{tpu_custom_call.1} parent=1 // pred_check
      _
    $region7: #{tpu_custom_call.1} parent=1 // pred_check_branch
      %17 = sbr.rel (0) target = $region9
    $region8: #{tpu_custom_call.1} parent=1 // pred_region
      _
    $region9: #{tpu_custom_call.1} parent=1 // pred_fallthru
      _
    // Predicated region
    $region10: #{tpu_custom_call.1} parent=1 // pred_check
      _
    $region11: #{tpu_custom_call.1} parent=1 // pred_check_branch
      %19 = sbr.rel (0) target = $region13
    $region12: #{tpu_custom_call.1} parent=1 // pred_region
      _
    $region13: #{tpu_custom_call.1} parent=1 // pred_fallthru
      _
    // Predicated region
    $region14: #{tpu_custom_call.1} parent=1 // pred_check
      _
    $region15: #{tpu_custom_call.1} parent=1 // pred_check_branch
      %21 = sbr.rel (0) target = $region17
    $region16: #{tpu_custom_call.1} parent=1 // pred_region
      _
    $region17: #{tpu_custom_call.1} parent=1 // pred_fallthru
      _
    // Predicated region
    $region18: #{tpu_custom_call.1} parent=1 // pred_check
      _
    $region19: #{tpu_custom_call.1} parent=1 // pred_check_branch
      %23 = sbr.rel (0) target = $region21
    $region20: #{tpu_custom_call.1} parent=1 // pred_region
      _
    $region21: #{tpu_custom_call.1} parent=1 // pred_fallthru
      _
    // Predicated region
    $region22: #{tpu_custom_call.1} parent=1 // pred_check
      _
    $region23: #{tpu_custom_call.1} parent=1 // pred_check_branch
      %25 = sbr.rel (0) target = $region25
    $region24: #{tpu_custom_call.1} parent=1 // pred_region
      _
    $region25: #{tpu_custom_call.1} parent=1 // pred_fallthru
      _
    %v26 = vld [vmem:[%s0] sm:$0xff]
    %v27 = vld [vmem:[%s0 + $0x8] sm:$0xff]
    %v28 = vld [vmem:[%s0 + $0x10] sm:$0xff]
    %v29 = vld [vmem:[%s0 + $0x18] sm:$0xff]
    %v30 = vld [vmem:[%s0 + $0x20] sm:$0xff]
    %v31 = vld [vmem:[%s0 + $0x28] sm:$0xff]
    %v32 = vld [vmem:[%s0 + $0x30] sm:$0xff]
    %v33 = vld [vmem:[%s0 + $0x38] sm:$0xff]
    %v34 = vld [vmem:[%s1] sm:$0x1]
    %36 = vset.pattern.permute.xlu0 0
    %37 = vperm.xlu0 %36, %v26
    %v38 = vpop.permute.xlu0 %37
    %41 = vset.pattern.permute.xlu0 0
    %42 = vperm.xlu0 %41, %v27
    %v43 = vpop.permute.xlu0 %42
    %46 = vset.pattern.permute.xlu0 0
    %47 = vperm.xlu0 %46, %v28
    %v48 = vpop.permute.xlu0 %47
    %51 = vset.pattern.permute.xlu0 0
    %52 = vperm.xlu0 %51, %v29
    %v53 = vpop.permute.xlu0 %52
    %56 = vset.pattern.permute.xlu0 0
    %57 = vperm.xlu0 %56, %v30
    %v58 = vpop.permute.xlu0 %57
    %61 = vset.pattern.permute.xlu0 0
    %62 = vperm.xlu0 %61, %v31
    %v63 = vpop.permute.xlu0 %62
    %66 = vset.pattern.permute.xlu0 0
    %67 = vperm.xlu0 %66, %v32
    %v68 = vpop.permute.xlu0 %67
    %71 = vset.pattern.permute.xlu0 0
    %72 = vperm.xlu0 %71, %v33
    %v73 = vpop.permute.xlu0 %72
    %v76 = vlaneseq
    %v77 = vshrl.u32 %v76, 7
    %v78 = vsub.s32 0, %v77
    %v79 = vrot.slane %v34, %v78
    %v81 = vmul.f32 %v38, %v79
    %v82 = vmul.f32 %v43, %v79
    %v83 = vmul.f32 %v48, %v79
    %v84 = vmul.f32 %v53, %v79
    %v85 = vmul.f32 %v58, %v79
    %v86 = vmul.f32 %v63, %v79
    %v87 = vmul.f32 %v68, %v79
    %v88 = vmul.f32 %v73, %v79
    %v89 = vld [vmem:[%s3] sm:$0x1]
    %v91 = vlaneseq
    %v92 = vshrl.u32 %v91, 7
    %v93 = vsub.s32 0, %v92
    %v94 = vrot.slane %v89, %v93
    %v96 = vadd.f32 %v81, %v94
    %v97 = vadd.f32 %v82, %v94
    %v98 = vadd.f32 %v83, %v94
    %v99 = vadd.f32 %v84, %v94
    %v100 = vadd.f32 %v85, %v94
    %v101 = vadd.f32 %v86, %v94
    %v102 = vadd.f32 %v87, %v94
    %v103 = vadd.f32 %v88, %v94
    %104 = vst [vmem:[#allocation2] sm:$0xff] %v96
    %105 = vst [vmem:[#allocation2 + $0x8] sm:$0xff] %v97
    %106 = vst [vmem:[#allocation2 + $0x10] sm:$0xff] %v98
    %107 = vst [vmem:[#allocation2 + $0x18] sm:$0xff] %v99
    %108 = vst [vmem:[#allocation2 + $0x20] sm:$0xff] %v100
    %109 = vst [vmem:[#allocation2 + $0x28] sm:$0xff] %v101
    %110 = vst [vmem:[#allocation2 + $0x30] sm:$0xff] %v102
    %111 = vst [vmem:[#allocation2 + $0x38] sm:$0xff] %v103
    %v112 = vld [vmem:[%s2] sm:$0xff]
    %v113 = vld [vmem:[%s2 + $0x8] sm:$0xff]
    %v114 = vld [vmem:[%s2 + $0x10] sm:$0xff]
    %v115 = vld [vmem:[%s2 + $0x18] sm:$0xff]
    %v116 = vld [vmem:[#allocation2] sm:$0xff]
    %vm117 = vcmask 261120
    %v119 = vsel %vm117, 0.0, 0
    %121 = vmatprep.subr.mxu0 0.0
    %122 = vmatpush1.msra.mxu0 %v112
    %123 = vmatprep.subr.mxu0 0.0
    %124 = vmatpush1.msra.mxu0 %v113
    %125 = vmatprep.subr.mxu0 0.0
    %126 = vmatpush1.msra.mxu0 %v114
    %127 = vmatprep.subr.mxu0 0.0
    %128 = vmatpush1.msra.mxu0 %v115
    %129 = vmatprep.subr.mxu0 0.0
    %130 = vmatpush1.msra.mxu0 0.0
    %131 = vmatprep.subr.mxu0 0.0
    %132 = vmatpush1.msra.mxu0 0.0
    %133 = vmatprep.subr.mxu0 0.0
    %134 = vmatpush1.msra.mxu0 0.0
    %135 = vmatprep.subr.mxu0 0.0
    %136 = vmatpush1.msra.mxu0 0.0
    %137 = vmatprep.subr.mxu0 0.0
    %138 = vmatpush1.msra.mxu0 0.0
    %139 = vmatprep.subr.mxu0 0.0
    %140 = vmatpush1.msra.mxu0 0.0
    %141 = vmatprep.subr.mxu0 0.0
    %142 = vmatpush1.msra.mxu0 0.0
    %143 = vmatprep.subr.mxu0 0.0
    %144 = vmatpush1.msra.mxu0 0.0
    %145 = vmatprep.subr.mxu0 0.0
    %146 = vmatpush1.msra.mxu0 0.0
    %147 = vmatprep.subr.mxu0 0.0
    %148 = vmatpush1.msra.mxu0 0.0
    %149 = vmatprep.subr.mxu0 0.0
    %150 = vmatpush1.msra.mxu0 0.0
    %151 = vmatprep.subr.mxu0 0.0
    %152 = vmatpush1.msra.mxu0 0.0
    %153 = vmatprep.subr.mxu0 0.0
    %154 = vmatpush1.msra.mxu0 0.0
    %155 = vmatprep.subr.mxu0 0.0
    %156 = vmatpush1.msra.mxu0 0.0
    %157 = vmatprep.subr.mxu0 0.0
    %158 = vmatpush1.msra.mxu0 0.0
    %159 = vmatprep.subr.mxu0 0.0
    %160 = vmatpush1.msra.mxu0 0.0
    %161 = vmatprep.subr.mxu0 0.0
    %162 = vmatpush1.msra.mxu0 0.0
    %163 = vmatprep.subr.mxu0 0.0
    %164 = vmatpush1.msra.mxu0 0.0
    %165 = vmatprep.subr.mxu0 0.0
    %166 = vmatpush1.msra.mxu0 0.0
    %167 = vmatprep.subr.mxu0 0.0
    %168 = vmatpush1.msra.mxu0 0.0
    %169 = vmatprep.subr.mxu0 0.0
    %170 = vmatpush1.msra.mxu0 0.0
    %171 = vmatprep.subr.mxu0 0.0
    %172 = vmatpush1.msra.mxu0 0.0
    %173 = vmatprep.subr.mxu0 0.0
    %174 = vmatpush1.msra.mxu0 0.0
    %175 = vmatprep.subr.mxu0 0.0
    %176 = vmatpush1.msra.mxu0 0.0
    %177 = vmatprep.subr.mxu0 0.0
    %178 = vmatpush1.msra.mxu0 0.0
    %179 = vmatprep.subr.mxu0 0.0
    %180 = vmatpush1.msra.mxu0 0.0
    %181 = vmatprep.subr.mxu0 0.0
    %182 = vmatpush1.msra.mxu0 0.0
    %183 = vmatprep.subr.mxu0 0.0
    %184 = vmatpush1.msra.mxu0 0.0
    %185 = vmatprep.mubr.f32.mxu0 0.0
    %186 = vmatmul.mubr.f32.gmra.mrb[0].mxu0 %v119
    %v187 = vpop.f32.mrb[0].mxu0
    %v188 = vadd.f32 0.0, %v187
    %v189 = vpop.f32.mrb[0].mxu0
    %190 = vdwg.mxu0
    %v191 = vadd.f32 %v116, %v188
    %v192 = vxor.u32 %v191, 2147483648
    %v193 = vmul.f32 %v192, 1.442695
    %v194 = vpow.pop %v193
    %v195 = vadd.f32 %v194, 1.0
    %v196 = vrcp.pop %v195
    %v197 = vmul.f32 1.0, %v196
    %v198 = vtanh.pop %v191
    %v199 = vmul.f32 %v197, 0.0
    %201 = vrot.lane.b32.xlu0 %v198, 64
    %v202 = vpop.permute.xlu0 %201
    %v204 = vmul.f32 %v197, %v202
    %206 = vrot.lane.b32.xlu0 %v204, 32
    %v207 = vpop.permute.xlu0 %206
    %v209 = vadd.f32 %v199, %v207
    %v210 = vtanh.pop %v209
    %212 = vrot.lane.b32.xlu0 %v210, 64
    %v213 = vpop.permute.xlu0 %212
    %v215 = vmul.f32 %v197, %v213
    %217 = vrot.lane.b32.xlu0 %v215, 32
    %v218 = vpop.permute.xlu0 %217
    %220 = vst.msk [vmem:[#allocation3] sm:$0xff] %vm117, %v218
    %s221 = scalar_lea.vmem [#allocation2], 8
    %v222 = vld [vmem:[%s221] sm:$0xff]
    %v223 = vsel %vm117, %v218, 0
    %225 = vmatprep.subr.mxu0 0.0
    %226 = vmatpush1.msra.mxu0 %v112
    %227 = vmatprep.subr.mxu0 0.0
    %228 = vmatpush1.msra.mxu0 %v113
    %229 = vmatprep.subr.mxu0 0.0
    %230 = vmatpush1.msra.mxu0 %v114
    %231 = vmatprep.subr.mxu0 0.0
    %232 = vmatpush1.msra.mxu0 %v115
    %233 = vmatprep.subr.mxu0 0.0
    %234 = vmatpush1.msra.mxu0 0.0
    %235 = vmatprep.subr.mxu0 0.0
    %236 = vmatpush1.msra.mxu0 0.0
    %237 = vmatprep.subr.mxu0 0.0
    %238 = vmatpush1.msra.mxu0 0.0
    %239 = vmatprep.subr.mxu0 0.0
    %240 = vmatpush1.msra.mxu0 0.0
    %241 = vmatprep.subr.mxu0 0.0
    %242 = vmatpush1.msra.mxu0 0.0
    %243 = vmatprep.subr.mxu0 0.0
    %244 = vmatpush1.msra.mxu0 0.0
    %245 = vmatprep.subr.mxu0 0.0
    %246 = vmatpush1.msra.mxu0 0.0
    %247 = vmatprep.subr.mxu0 0.0
    %248 = vmatpush1.msra.mxu0 0.0
    %249 = vmatprep.subr.mxu0 0.0
    %250 = vmatpush1.msra.mxu0 0.0
    %251 = vmatprep.subr.mxu0 0.0
    %252 = vmatpush1.msra.mxu0 0.0
    %253 = vmatprep.subr.mxu0 0.0
    %254 = vmatpush1.msra.mxu0 0.0
    %255 = vmatprep.subr.mxu0 0.0
    %256 = vmatpush1.msra.mxu0 0.0
    %257 = vmatprep.subr.mxu0 0.0
    %258 = vmatpush1.msra.mxu0 0.0
    %259 = vmatprep.subr.mxu0 0.0
    %260 = vmatpush1.msra.mxu0 0.0
    %261 = vmatprep.subr.mxu0 0.0
    %262 = vmatpush1.msra.mxu0 0.0
    %263 = vmatprep.subr.mxu0 0.0
    %264 = vmatpush1.msra.mxu0 0.0
    %265 = vmatprep.subr.mxu0 0.0
    %266 = vmatpush1.msra.mxu0 0.0
    %267 = vmatprep.subr.mxu0 0.0
    %268 = vmatpush1.msra.mxu0 0.0
    %269 = vmatprep.subr.mxu0 0.0
    %270 = vmatpush1.msra.mxu0 0.0
    %271 = vmatprep.subr.mxu0 0.0
    %272 = vmatpush1.msra.mxu0 0.0
    %273 = vmatprep.subr.mxu0 0.0
    %274 = vmatpush1.msra.mxu0 0.0
    %275 = vmatprep.subr.mxu0 0.0
    %276 = vmatpush1.msra.mxu0 0.0
    %277 = vmatprep.subr.mxu0 0.0
    %278 = vmatpush1.msra.mxu0 0.0
    %279 = vmatprep.subr.mxu0 0.0
    %280 = vmatpush1.msra.mxu0 0.0
    %281 = vmatprep.subr.mxu0 0.0
    %282 = vmatpush1.msra.mxu0 0.0
    %283 = vmatprep.subr.mxu0 0.0
    %284 = vmatpush1.msra.mxu0 0.0
    %285 = vmatprep.subr.mxu0 0.0
    %286 = vmatpush1.msra.mxu0 0.0
    %287 = vmatprep.subr.mxu0 0.0
    %288 = vmatpush1.msra.mxu0 0.0
    %289 = vmatprep.mubr.f32.mxu0 0.0
    %290 = vmatmul.mubr.f32.gmra.mrb[0].mxu0 %v223
    %v291 = vpop.f32.mrb[0].mxu0
    %v292 = vadd.f32 0.0, %v291
    %v293 = vpop.f32.mrb[0].mxu0
    %294 = vdwg.mxu0
    %v295 = vadd.f32 %v222, %v292
    %v296 = vxor.u32 %v295, 2147483648
    %v297 = vmul.f32 %v296, 1.442695
    %v298 = vpow.pop %v297
    %v299 = vadd.f32 %v298, 1.0
    %v300 = vrcp.pop %v299
    %v301 = vmul.f32 1.0, %v300
    %v302 = vtanh.pop %v295
    %v303 = vmul.f32 %v301, %v209
    %305 = vrot.lane.b32.xlu0 %v302, 64
    %v306 = vpop.permute.xlu0 %305
    %v308 = vmul.f32 %v301, %v306
    %310 = vrot.lane.b32.xlu0 %v308, 32
    %v311 = vpop.permute.xlu0 %310
    %v313 = vadd.f32 %v303, %v311
    %v314 = vtanh.pop %v313
    %316 = vrot.lane.b32.xlu0 %v314, 64
    %v317 = vpop.permute.xlu0 %316
    %v319 = vmul.f32 %v301, %v317
    %321 = vrot.lane.b32.xlu0 %v319, 32
    %v322 = vpop.permute.xlu0 %321
    %s324 = scalar_lea.vmem [#allocation3], 8
    %325 = vst.msk [vmem:[%s324] sm:$0xff] %vm117, %v322
    %s326 = scalar_lea.vmem [#allocation2], 16
    %v327 = vld [vmem:[%s326] sm:$0xff]
    %v328 = vsel %vm117, %v322, 0
    %330 = vmatprep.subr.mxu0 0.0
    %331 = vmatpush1.msra.mxu0 %v112
    %332 = vmatprep.subr.mxu0 0.0
    %333 = vmatpush1.msra.mxu0 %v113
    %334 = vmatprep.subr.mxu0 0.0
    %335 = vmatpush1.msra.mxu0 %v114
    %336 = vmatprep.subr.mxu0 0.0
    %337 = vmatpush1.msra.mxu0 %v115
    %338 = vmatprep.subr.mxu0 0.0
    %339 = vmatpush1.msra.mxu0 0.0
    %340 = vmatprep.subr.mxu0 0.0
    %341 = vmatpush1.msra.mxu0 0.0
    %342 = vmatprep.subr.mxu0 0.0
    %343 = vmatpush1.msra.mxu0 0.0
    %344 = vmatprep.subr.mxu0 0.0
    %345 = vmatpush1.msra.mxu0 0.0
    %346 = vmatprep.subr.mxu0 0.0
    %347 = vmatpush1.msra.mxu0 0.0
    %348 = vmatprep.subr.mxu0 0.0
    %349 = vmatpush1.msra.mxu0 0.0
    %350 = vmatprep.subr.mxu0 0.0
    %351 = vmatpush1.msra.mxu0 0.0
    %352 = vmatprep.subr.mxu0 0.0
    %353 = vmatpush1.msra.mxu0 0.0
    %354 = vmatprep.subr.mxu0 0.0
    %355 = vmatpush1.msra.mxu0 0.0
    %356 = vmatprep.subr.mxu0 0.0
    %357 = vmatpush1.msra.mxu0 0.0
    %358 = vmatprep.subr.mxu0 0.0
    %359 = vmatpush1.msra.mxu0 0.0
    %360 = vmatprep.subr.mxu0 0.0
    %361 = vmatpush1.msra.mxu0 0.0
    %362 = vmatprep.subr.mxu0 0.0
    %363 = vmatpush1.msra.mxu0 0.0
    %364 = vmatprep.subr.mxu0 0.0
    %365 = vmatpush1.msra.mxu0 0.0
    %366 = vmatprep.subr.mxu0 0.0
    %367 = vmatpush1.msra.mxu0 0.0
    %368 = vmatprep.subr.mxu0 0.0
    %369 = vmatpush1.msra.mxu0 0.0
    %370 = vmatprep.subr.mxu0 0.0
    %371 = vmatpush1.msra.mxu0 0.0
    %372 = vmatprep.subr.mxu0 0.0
    %373 = vmatpush1.msra.mxu0 0.0
    %374 = vmatprep.subr.mxu0 0.0
    %375 = vmatpush1.msra.mxu0 0.0
    %376 = vmatprep.subr.mxu0 0.0
    %377 = vmatpush1.msra.mxu0 0.0
    %378 = vmatprep.subr.mxu0 0.0
    %379 = vmatpush1.msra.mxu0 0.0
    %380 = vmatprep.subr.mxu0 0.0
    %381 = vmatpush1.msra.mxu0 0.0
    %382 = vmatprep.subr.mxu0 0.0
    %383 = vmatpush1.msra.mxu0 0.0
    %384 = vmatprep.subr.mxu0 0.0
    %385 = vmatpush1.msra.mxu0 0.0
    %386 = vmatprep.subr.mxu0 0.0
    %387 = vmatpush1.msra.mxu0 0.0
    %388 = vmatprep.subr.mxu0 0.0
    %389 = vmatpush1.msra.mxu0 0.0
    %390 = vmatprep.subr.mxu0 0.0
    %391 = vmatpush1.msra.mxu0 0.0
    %392 = vmatprep.subr.mxu0 0.0
    %393 = vmatpush1.msra.mxu0 0.0
    %394 = vmatprep.mubr.f32.mxu0 0.0
    %395 = vmatmul.mubr.f32.gmra.mrb[0].mxu0 %v328
    %v396 = vpop.f32.mrb[0].mxu0
    %v397 = vadd.f32 0.0, %v396
    %v398 = vpop.f32.mrb[0].mxu0
    %399 = vdwg.mxu0
    %v400 = vadd.f32 %v327, %v397
    %v401 = vxor.u32 %v400, 2147483648
    %v402 = vmul.f32 %v401, 1.442695
    %v403 = vpow.pop %v402
    %v404 = vadd.f32 %v403, 1.0
    %v405 = vrcp.pop %v404
    %v406 = vmul.f32 1.0, %v405
    %v407 = vtanh.pop %v400
    %v408 = vmul.f32 %v406, %v313
    %410 = vrot.lane.b32.xlu0 %v407, 64
    %v411 = vpop.permute.xlu0 %410
    %v413 = vmul.f32 %v406, %v411
    %415 = vrot.lane.b32.xlu0 %v413, 32
    %v416 = vpop.permute.xlu0 %415
    %v418 = vadd.f32 %v408, %v416
    %v419 = vtanh.pop %v418
    %421 = vrot.lane.b32.xlu0 %v419, 64
    %v422 = vpop.permute.xlu0 %421
    %v424 = vmul.f32 %v406, %v422
    %426 = vrot.lane.b32.xlu0 %v424, 32
    %v427 = vpop.permute.xlu0 %426
    %s429 = scalar_lea.vmem [#allocation3], 16
    %430 = vst.msk [vmem:[%s429] sm:$0xff] %vm117, %v427
    %s431 = scalar_lea.vmem [#allocation2], 24
    %v432 = vld [vmem:[%s431] sm:$0xff]
    %v433 = vsel %vm117, %v427, 0
    %435 = vmatprep.subr.mxu0 0.0
    %436 = vmatpush1.msra.mxu0 %v112
    %437 = vmatprep.subr.mxu0 0.0
    %438 = vmatpush1.msra.mxu0 %v113
    %439 = vmatprep.subr.mxu0 0.0
    %440 = vmatpush1.msra.mxu0 %v114
    %441 = vmatprep.subr.mxu0 0.0
    %442 = vmatpush1.msra.mxu0 %v115
    %443 = vmatprep.subr.mxu0 0.0
    %444 = vmatpush1.msra.mxu0 0.0
    %445 = vmatprep.subr.mxu0 0.0
    %446 = vmatpush1.msra.mxu0 0.0
    %447 = vmatprep.subr.mxu0 0.0
    %448 = vmatpush1.msra.mxu0 0.0
    %449 = vmatprep.subr.mxu0 0.0
    %450 = vmatpush1.msra.mxu0 0.0
    %451 = vmatprep.subr.mxu0 0.0
    %452 = vmatpush1.msra.mxu0 0.0
    %453 = vmatprep.subr.mxu0 0.0
    %454 = vmatpush1.msra.mxu0 0.0
    %455 = vmatprep.subr.mxu0 0.0
    %456 = vmatpush1.msra.mxu0 0.0
    %457 = vmatprep.subr.mxu0 0.0
    %458 = vmatpush1.msra.mxu0 0.0
    %459 = vmatprep.subr.mxu0 0.0
    %460 = vmatpush1.msra.mxu0 0.0
    %461 = vmatprep.subr.mxu0 0.0
    %462 = vmatpush1.msra.mxu0 0.0
    %463 = vmatprep.subr.mxu0 0.0
    %464 = vmatpush1.msra.mxu0 0.0
    %465 = vmatprep.subr.mxu0 0.0
    %466 = vmatpush1.msra.mxu0 0.0
    %467 = vmatprep.subr.mxu0 0.0
    %468 = vmatpush1.msra.mxu0 0.0
    %469 = vmatprep.subr.mxu0 0.0
    %470 = vmatpush1.msra.mxu0 0.0
    %471 = vmatprep.subr.mxu0 0.0
    %472 = vmatpush1.msra.mxu0 0.0
    %473 = vmatprep.subr.mxu0 0.0
    %474 = vmatpush1.msra.mxu0 0.0
    %475 = vmatprep.subr.mxu0 0.0
    %476 = vmatpush1.msra.mxu0 0.0
    %477 = vmatprep.subr.mxu0 0.0
    %478 = vmatpush1.msra.mxu0 0.0
    %479 = vmatprep.subr.mxu0 0.0
    %480 = vmatpush1.msra.mxu0 0.0
    %481 = vmatprep.subr.mxu0 0.0
    %482 = vmatpush1.msra.mxu0 0.0
    %483 = vmatprep.subr.mxu0 0.0
    %484 = vmatpush1.msra.mxu0 0.0
    %485 = vmatprep.subr.mxu0 0.0
    %486 = vmatpush1.msra.mxu0 0.0
    %487 = vmatprep.subr.mxu0 0.0
    %488 = vmatpush1.msra.mxu0 0.0
    %489 = vmatprep.subr.mxu0 0.0
    %490 = vmatpush1.msra.mxu0 0.0
    %491 = vmatprep.subr.mxu0 0.0
    %492 = vmatpush1.msra.mxu0 0.0
    %493 = vmatprep.subr.mxu0 0.0
    %494 = vmatpush1.msra.mxu0 0.0
    %495 = vmatprep.subr.mxu0 0.0
    %496 = vmatpush1.msra.mxu0 0.0
    %497 = vmatprep.subr.mxu0 0.0
    %498 = vmatpush1.msra.mxu0 0.0
    %499 = vmatprep.mubr.f32.mxu0 0.0
    %500 = vmatmul.mubr.f32.gmra.mrb[0].mxu0 %v433
    %v501 = vpop.f32.mrb[0].mxu0
    %v502 = vadd.f32 0.0, %v501
    %v503 = vpop.f32.mrb[0].mxu0
    %504 = vdwg.mxu0
    %v505 = vadd.f32 %v432, %v502
    %v506 = vxor.u32 %v505, 2147483648
    %v507 = vmul.f32 %v506, 1.442695
    %v508 = vpow.pop %v507
    %v509 = vadd.f32 %v508, 1.0
    %v510 = vrcp.pop %v509
    %v511 = vmul.f32 1.0, %v510
    %v512 = vtanh.pop %v505
    %v513 = vmul.f32 %v511, %v418
    %515 = vrot.lane.b32.xlu0 %v512, 64
    %v516 = vpop.permute.xlu0 %515
    %v518 = vmul.f32 %v511, %v516
    %520 = vrot.lane.b32.xlu0 %v518, 32
    %v521 = vpop.permute.xlu0 %520
    %v523 = vadd.f32 %v513, %v521
    %v524 = vtanh.pop %v523
    %526 = vrot.lane.b32.xlu0 %v524, 64
    %v527 = vpop.permute.xlu0 %526
    %v529 = vmul.f32 %v511, %v527
    %531 = vrot.lane.b32.xlu0 %v529, 32
    %v532 = vpop.permute.xlu0 %531
    %s534 = scalar_lea.vmem [#allocation3], 24
    %535 = vst.msk [vmem:[%s534] sm:$0xff] %vm117, %v532
    %s536 = scalar_lea.vmem [#allocation2], 32
    %v537 = vld [vmem:[%s536] sm:$0xff]
    %v538 = vsel %vm117, %v532, 0
    %540 = vmatprep.subr.mxu0 0.0
    %541 = vmatpush1.msra.mxu0 %v112
    %542 = vmatprep.subr.mxu0 0.0
    %543 = vmatpush1.msra.mxu0 %v113
    %544 = vmatprep.subr.mxu0 0.0
    %545 = vmatpush1.msra.mxu0 %v114
    %546 = vmatprep.subr.mxu0 0.0
    %547 = vmatpush1.msra.mxu0 %v115
    %548 = vmatprep.subr.mxu0 0.0
    %549 = vmatpush1.msra.mxu0 0.0
    %550 = vmatprep.subr.mxu0 0.0
    %551 = vmatpush1.msra.mxu0 0.0
    %552 = vmatprep.subr.mxu0 0.0
    %553 = vmatpush1.msra.mxu0 0.0
    %554 = vmatprep.subr.mxu0 0.0
    %555 = vmatpush1.msra.mxu0 0.0
    %556 = vmatprep.subr.mxu0 0.0
    %557 = vmatpush1.msra.mxu0 0.0
    %558 = vmatprep.subr.mxu0 0.0
    %559 = vmatpush1.msra.mxu0 0.0
    %560 = vmatprep.subr.mxu0 0.0
    %561 = vmatpush1.msra.mxu0 0.0
    %562 = vmatprep.subr.mxu0 0.0
    %563 = vmatpush1.msra.mxu0 0.0
    %564 = vmatprep.subr.mxu0 0.0
    %565 = vmatpush1.msra.mxu0 0.0
    %566 = vmatprep.subr.mxu0 0.0
    %567 = vmatpush1.msra.mxu0 0.0
    %568 = vmatprep.subr.mxu0 0.0
    %569 = vmatpush1.msra.mxu0 0.0
    %570 = vmatprep.subr.mxu0 0.0
    %571 = vmatpush1.msra.mxu0 0.0
    %572 = vmatprep.subr.mxu0 0.0
    %573 = vmatpush1.msra.mxu0 0.0
    %574 = vmatprep.subr.mxu0 0.0
    %575 = vmatpush1.msra.mxu0 0.0
    %576 = vmatprep.subr.mxu0 0.0
    %577 = vmatpush1.msra.mxu0 0.0
    %578 = vmatprep.subr.mxu0 0.0
    %579 = vmatpush1.msra.mxu0 0.0
    %580 = vmatprep.subr.mxu0 0.0
    %581 = vmatpush1.msra.mxu0 0.0
    %582 = vmatprep.subr.mxu0 0.0
    %583 = vmatpush1.msra.mxu0 0.0
    %584 = vmatprep.subr.mxu0 0.0
    %585 = vmatpush1.msra.mxu0 0.0
    %586 = vmatprep.subr.mxu0 0.0
    %587 = vmatpush1.msra.mxu0 0.0
    %588 = vmatprep.subr.mxu0 0.0
    %589 = vmatpush1.msra.mxu0 0.0
    %590 = vmatprep.subr.mxu0 0.0
    %591 = vmatpush1.msra.mxu0 0.0
    %592 = vmatprep.subr.mxu0 0.0
    %593 = vmatpush1.msra.mxu0 0.0
    %594 = vmatprep.subr.mxu0 0.0
    %595 = vmatpush1.msra.mxu0 0.0
    %596 = vmatprep.subr.mxu0 0.0
    %597 = vmatpush1.msra.mxu0 0.0
    %598 = vmatprep.subr.mxu0 0.0
    %599 = vmatpush1.msra.mxu0 0.0
    %600 = vmatprep.subr.mxu0 0.0
    %601 = vmatpush1.msra.mxu0 0.0
    %602 = vmatprep.subr.mxu0 0.0
    %603 = vmatpush1.msra.mxu0 0.0
    %604 = vmatprep.mubr.f32.mxu0 0.0
    %605 = vmatmul.mubr.f32.gmra.mrb[0].mxu0 %v538
    %v606 = vpop.f32.mrb[0].mxu0
    %v607 = vadd.f32 0.0, %v606
    %v608 = vpop.f32.mrb[0].mxu0
    %609 = vdwg.mxu0
    %v610 = vadd.f32 %v537, %v607
    %v611 = vxor.u32 %v610, 2147483648
    %v612 = vmul.f32 %v611, 1.442695
    %v613 = vpow.pop %v612
    %v614 = vadd.f32 %v613, 1.0
    %v615 = vrcp.pop %v614
    %v616 = vmul.f32 1.0, %v615
    %v617 = vtanh.pop %v610
    %v618 = vmul.f32 %v616, %v523
    %620 = vrot.lane.b32.xlu0 %v617, 64
    %v621 = vpop.permute.xlu0 %620
    %v623 = vmul.f32 %v616, %v621
    %625 = vrot.lane.b32.xlu0 %v623, 32
    %v626 = vpop.permute.xlu0 %625
    %v628 = vadd.f32 %v618, %v626
    %v629 = vtanh.pop %v628
    %631 = vrot.lane.b32.xlu0 %v629, 64
    %v632 = vpop.permute.xlu0 %631
    %v634 = vmul.f32 %v616, %v632
    %636 = vrot.lane.b32.xlu0 %v634, 32
    %v637 = vpop.permute.xlu0 %636
    %s639 = scalar_lea.vmem [#allocation3], 32
    %640 = vst.msk [vmem:[%s639] sm:$0xff] %vm117, %v637
    %s641 = scalar_lea.vmem [#allocation2], 40
    %v642 = vld [vmem:[%s641] sm:$0xff]
    %v643 = vsel %vm117, %v637, 0
    %645 = vmatprep.subr.mxu0 0.0
    %646 = vmatpush1.msra.mxu0 %v112
    %647 = vmatprep.subr.mxu0 0.0
    %648 = vmatpush1.msra.mxu0 %v113
    %649 = vmatprep.subr.mxu0 0.0
    %650 = vmatpush1.msra.mxu0 %v114
    %651 = vmatprep.subr.mxu0 0.0
    %652 = vmatpush1.msra.mxu0 %v115
    %653 = vmatprep.subr.mxu0 0.0
    %654 = vmatpush1.msra.mxu0 0.0
    %655 = vmatprep.subr.mxu0 0.0
    %656 = vmatpush1.msra.mxu0 0.0
    %657 = vmatprep.subr.mxu0 0.0
    %658 = vmatpush1.msra.mxu0 0.0
    %659 = vmatprep.subr.mxu0 0.0
    %660 = vmatpush1.msra.mxu0 0.0
    %661 = vmatprep.subr.mxu0 0.0
    %662 = vmatpush1.msra.mxu0 0.0
    %663 = vmatprep.subr.mxu0 0.0
    %664 = vmatpush1.msra.mxu0 0.0
    %665 = vmatprep.subr.mxu0 0.0
    %666 = vmatpush1.msra.mxu0 0.0
    %667 = vmatprep.subr.mxu0 0.0
    %668 = vmatpush1.msra.mxu0 0.0
    %669 = vmatprep.subr.mxu0 0.0
    %670 = vmatpush1.msra.mxu0 0.0
    %671 = vmatprep.subr.mxu0 0.0
    %672 = vmatpush1.msra.mxu0 0.0
    %673 = vmatprep.subr.mxu0 0.0
    %674 = vmatpush1.msra.mxu0 0.0
    %675 = vmatprep.subr.mxu0 0.0
    %676 = vmatpush1.msra.mxu0 0.0
    %677 = vmatprep.subr.mxu0 0.0
    %678 = vmatpush1.msra.mxu0 0.0
    %679 = vmatprep.subr.mxu0 0.0
    %680 = vmatpush1.msra.mxu0 0.0
    %681 = vmatprep.subr.mxu0 0.0
    %682 = vmatpush1.msra.mxu0 0.0
    %683 = vmatprep.subr.mxu0 0.0
    %684 = vmatpush1.msra.mxu0 0.0
    %685 = vmatprep.subr.mxu0 0.0
    %686 = vmatpush1.msra.mxu0 0.0
    %687 = vmatprep.subr.mxu0 0.0
    %688 = vmatpush1.msra.mxu0 0.0
    %689 = vmatprep.subr.mxu0 0.0
    %690 = vmatpush1.msra.mxu0 0.0
    %691 = vmatprep.subr.mxu0 0.0
    %692 = vmatpush1.msra.mxu0 0.0
    %693 = vmatprep.subr.mxu0 0.0
    %694 = vmatpush1.msra.mxu0 0.0
    %695 = vmatprep.subr.mxu0 0.0
    %696 = vmatpush1.msra.mxu0 0.0
    %697 = vmatprep.subr.mxu0 0.0
    %698 = vmatpush1.msra.mxu0 0.0
    %699 = vmatprep.subr.mxu0 0.0
    %700 = vmatpush1.msra.mxu0 0.0
    %701 = vmatprep.subr.mxu0 0.0
    %702 = vmatpush1.msra.mxu0 0.0
    %703 = vmatprep.subr.mxu0 0.0
    %704 = vmatpush1.msra.mxu0 0.0
    %705 = vmatprep.subr.mxu0 0.0
    %706 = vmatpush1.msra.mxu0 0.0
    %707 = vmatprep.subr.mxu0 0.0
    %708 = vmatpush1.msra.mxu0 0.0
    %709 = vmatprep.mubr.f32.mxu0 0.0
    %710 = vmatmul.mubr.f32.gmra.mrb[0].mxu0 %v643
    %v711 = vpop.f32.mrb[0].mxu0
    %v712 = vadd.f32 0.0, %v711
    %v713 = vpop.f32.mrb[0].mxu0
    %714 = vdwg.mxu0
    %v715 = vadd.f32 %v642, %v712
    %v716 = vxor.u32 %v715, 2147483648
    %v717 = vmul.f32 %v716, 1.442695
    %v718 = vpow.pop %v717
    %v719 = vadd.f32 %v718, 1.0
    %v720 = vrcp.pop %v719
    %v721 = vmul.f32 1.0, %v720
    %v722 = vtanh.pop %v715
    %v723 = vmul.f32 %v721, %v628
    %725 = vrot.lane.b32.xlu0 %v722, 64
    %v726 = vpop.permute.xlu0 %725
    %v728 = vmul.f32 %v721, %v726
    %730 = vrot.lane.b32.xlu0 %v728, 32
    %v731 = vpop.permute.xlu0 %730
    %v733 = vadd.f32 %v723, %v731
    %v734 = vtanh.pop %v733
    %736 = vrot.lane.b32.xlu0 %v734, 64
    %v737 = vpop.permute.xlu0 %736
    %v739 = vmul.f32 %v721, %v737
    %741 = vrot.lane.b32.xlu0 %v739, 32
    %v742 = vpop.permute.xlu0 %741
    %s744 = scalar_lea.vmem [#allocation3], 40
    %745 = vst.msk [vmem:[%s744] sm:$0xff] %vm117, %v742
    %s746 = scalar_lea.vmem [#allocation2], 48
    %v747 = vld [vmem:[%s746] sm:$0xff]
    %v748 = vsel %vm117, %v742, 0
    %750 = vmatprep.subr.mxu0 0.0
    %751 = vmatpush1.msra.mxu0 %v112
    %752 = vmatprep.subr.mxu0 0.0
    %753 = vmatpush1.msra.mxu0 %v113
    %754 = vmatprep.subr.mxu0 0.0
    %755 = vmatpush1.msra.mxu0 %v114
    %756 = vmatprep.subr.mxu0 0.0
    %757 = vmatpush1.msra.mxu0 %v115
    %758 = vmatprep.subr.mxu0 0.0
    %759 = vmatpush1.msra.mxu0 0.0
    %760 = vmatprep.subr.mxu0 0.0
    %761 = vmatpush1.msra.mxu0 0.0
    %762 = vmatprep.subr.mxu0 0.0
    %763 = vmatpush1.msra.mxu0 0.0
    %764 = vmatprep.subr.mxu0 0.0
    %765 = vmatpush1.msra.mxu0 0.0
    %766 = vmatprep.subr.mxu0 0.0
    %767 = vmatpush1.msra.mxu0 0.0
    %768 = vmatprep.subr.mxu0 0.0
    %769 = vmatpush1.msra.mxu0 0.0
    %770 = vmatprep.subr.mxu0 0.0
    %771 = vmatpush1.msra.mxu0 0.0
    %772 = vmatprep.subr.mxu0 0.0
    %773 = vmatpush1.msra.mxu0 0.0
    %774 = vmatprep.subr.mxu0 0.0
    %775 = vmatpush1.msra.mxu0 0.0
    %776 = vmatprep.subr.mxu0 0.0
    %777 = vmatpush1.msra.mxu0 0.0
    %778 = vmatprep.subr.mxu0 0.0
    %779 = vmatpush1.msra.mxu0 0.0
    %780 = vmatprep.subr.mxu0 0.0
    %781 = vmatpush1.msra.mxu0 0.0
    %782 = vmatprep.subr.mxu0 0.0
    %783 = vmatpush1.msra.mxu0 0.0
    %784 = vmatprep.subr.mxu0 0.0
    %785 = vmatpush1.msra.mxu0 0.0
    %786 = vmatprep.subr.mxu0 0.0
    %787 = vmatpush1.msra.mxu0 0.0
    %788 = vmatprep.subr.mxu0 0.0
    %789 = vmatpush1.msra.mxu0 0.0
    %790 = vmatprep.subr.mxu0 0.0
    %791 = vmatpush1.msra.mxu0 0.0
    %792 = vmatprep.subr.mxu0 0.0
    %793 = vmatpush1.msra.mxu0 0.0
    %794 = vmatprep.subr.mxu0 0.0
    %795 = vmatpush1.msra.mxu0 0.0
    %796 = vmatprep.subr.mxu0 0.0
    %797 = vmatpush1.msra.mxu0 0.0
    %798 = vmatprep.subr.mxu0 0.0
    %799 = vmatpush1.msra.mxu0 0.0
    %800 = vmatprep.subr.mxu0 0.0
    %801 = vmatpush1.msra.mxu0 0.0
    %802 = vmatprep.subr.mxu0 0.0
    %803 = vmatpush1.msra.mxu0 0.0
    %804 = vmatprep.subr.mxu0 0.0
    %805 = vmatpush1.msra.mxu0 0.0
    %806 = vmatprep.subr.mxu0 0.0
    %807 = vmatpush1.msra.mxu0 0.0
    %808 = vmatprep.subr.mxu0 0.0
    %809 = vmatpush1.msra.mxu0 0.0
    %810 = vmatprep.subr.mxu0 0.0
    %811 = vmatpush1.msra.mxu0 0.0
    %812 = vmatprep.subr.mxu0 0.0
    %813 = vmatpush1.msra.mxu0 0.0
    %814 = vmatprep.mubr.f32.mxu0 0.0
    %815 = vmatmul.mubr.f32.gmra.mrb[0].mxu0 %v748
    %v816 = vpop.f32.mrb[0].mxu0
    %v817 = vadd.f32 0.0, %v816
    %v818 = vpop.f32.mrb[0].mxu0
    %819 = vdwg.mxu0
    %v820 = vadd.f32 %v747, %v817
    %v821 = vxor.u32 %v820, 2147483648
    %v822 = vmul.f32 %v821, 1.442695
    %v823 = vpow.pop %v822
    %v824 = vadd.f32 %v823, 1.0
    %v825 = vrcp.pop %v824
    %v826 = vmul.f32 1.0, %v825
    %v827 = vtanh.pop %v820
    %v828 = vmul.f32 %v826, %v733
    %830 = vrot.lane.b32.xlu0 %v827, 64
    %v831 = vpop.permute.xlu0 %830
    %v833 = vmul.f32 %v826, %v831
    %835 = vrot.lane.b32.xlu0 %v833, 32
    %v836 = vpop.permute.xlu0 %835
    %v838 = vadd.f32 %v828, %v836
    %v839 = vtanh.pop %v838
    %841 = vrot.lane.b32.xlu0 %v839, 64
    %v842 = vpop.permute.xlu0 %841
    %v844 = vmul.f32 %v826, %v842
    %846 = vrot.lane.b32.xlu0 %v844, 32
    %v847 = vpop.permute.xlu0 %846
    %s849 = scalar_lea.vmem [#allocation3], 48
    %850 = vst.msk [vmem:[%s849] sm:$0xff] %vm117, %v847
    %s851 = scalar_lea.vmem [#allocation2], 56
    %v852 = vld [vmem:[%s851] sm:$0xff]
    %v853 = vsel %vm117, %v847, 0
    %855 = vmatprep.subr.mxu0 0.0
    %856 = vmatpush1.msra.mxu0 %v112
    %857 = vmatprep.subr.mxu0 0.0
    %858 = vmatpush1.msra.mxu0 %v113
    %859 = vmatprep.subr.mxu0 0.0
    %860 = vmatpush1.msra.mxu0 %v114
    %861 = vmatprep.subr.mxu0 0.0
    %862 = vmatpush1.msra.mxu0 %v115
    %863 = vmatprep.subr.mxu0 0.0
    %864 = vmatpush1.msra.mxu0 0.0
    %865 = vmatprep.subr.mxu0 0.0
    %866 = vmatpush1.msra.mxu0 0.0
    %867 = vmatprep.subr.mxu0 0.0
    %868 = vmatpush1.msra.mxu0 0.0
    %869 = vmatprep.subr.mxu0 0.0
    %870 = vmatpush1.msra.mxu0 0.0
    %871 = vmatprep.subr.mxu0 0.0
    %872 = vmatpush1.msra.mxu0 0.0
    %873 = vmatprep.subr.mxu0 0.0
    %874 = vmatpush1.msra.mxu0 0.0
    %875 = vmatprep.subr.mxu0 0.0
    %876 = vmatpush1.msra.mxu0 0.0
    %877 = vmatprep.subr.mxu0 0.0
    %878 = vmatpush1.msra.mxu0 0.0
    %879 = vmatprep.subr.mxu0 0.0
    %880 = vmatpush1.msra.mxu0 0.0
    %881 = vmatprep.subr.mxu0 0.0
    %882 = vmatpush1.msra.mxu0 0.0
    %883 = vmatprep.subr.mxu0 0.0
    %884 = vmatpush1.msra.mxu0 0.0
    %885 = vmatprep.subr.mxu0 0.0
    %886 = vmatpush1.msra.mxu0 0.0
    %887 = vmatprep.subr.mxu0 0.0
    %888 = vmatpush1.msra.mxu0 0.0
    %889 = vmatprep.subr.mxu0 0.0
    %890 = vmatpush1.msra.mxu0 0.0
    %891 = vmatprep.subr.mxu0 0.0
    %892 = vmatpush1.msra.mxu0 0.0
    %893 = vmatprep.subr.mxu0 0.0
    %894 = vmatpush1.msra.mxu0 0.0
    %895 = vmatprep.subr.mxu0 0.0
    %896 = vmatpush1.msra.mxu0 0.0
    %897 = vmatprep.subr.mxu0 0.0
    %898 = vmatpush1.msra.mxu0 0.0
    %899 = vmatprep.subr.mxu0 0.0
    %900 = vmatpush1.msra.mxu0 0.0
    %901 = vmatprep.subr.mxu0 0.0
    %902 = vmatpush1.msra.mxu0 0.0
    %903 = vmatprep.subr.mxu0 0.0
    %904 = vmatpush1.msra.mxu0 0.0
    %905 = vmatprep.subr.mxu0 0.0
    %906 = vmatpush1.msra.mxu0 0.0
    %907 = vmatprep.subr.mxu0 0.0
    %908 = vmatpush1.msra.mxu0 0.0
    %909 = vmatprep.subr.mxu0 0.0
    %910 = vmatpush1.msra.mxu0 0.0
    %911 = vmatprep.subr.mxu0 0.0
    %912 = vmatpush1.msra.mxu0 0.0
    %913 = vmatprep.subr.mxu0 0.0
    %914 = vmatpush1.msra.mxu0 0.0
    %915 = vmatprep.subr.mxu0 0.0
    %916 = vmatpush1.msra.mxu0 0.0
    %917 = vmatprep.subr.mxu0 0.0
    %918 = vmatpush1.msra.mxu0 0.0
    %919 = vmatprep.mubr.f32.mxu0 0.0
    %920 = vmatmul.mubr.f32.gmra.mrb[0].mxu0 %v853
    %v921 = vpop.f32.mrb[0].mxu0
    %v922 = vadd.f32 0.0, %v921
    %v923 = vpop.f32.mrb[0].mxu0
    %924 = vdwg.mxu0
    %v925 = vadd.f32 %v852, %v922
    %v926 = vxor.u32 %v925, 2147483648
    %v927 = vmul.f32 %v926, 1.442695
    %v928 = vpow.pop %v927
    %v929 = vadd.f32 %v928, 1.0
    %v930 = vrcp.pop %v929
    %v931 = vmul.f32 1.0, %v930
    %v932 = vtanh.pop %v925
    %v933 = vmul.f32 %v931, %v838
    %935 = vrot.lane.b32.xlu0 %v932, 64
    %v936 = vpop.permute.xlu0 %935
    %v938 = vmul.f32 %v931, %v936
    %940 = vrot.lane.b32.xlu0 %v938, 32
    %v941 = vpop.permute.xlu0 %940
    %v943 = vadd.f32 %v933, %v941
    %v944 = vtanh.pop %v943
    %946 = vrot.lane.b32.xlu0 %v944, 64
    %v947 = vpop.permute.xlu0 %946
    %v949 = vmul.f32 %v931, %v947
    %951 = vrot.lane.b32.xlu0 %v949, 32
    %v952 = vpop.permute.xlu0 %951
    %s954 = scalar_lea.vmem [#allocation3], 56
    %955 = vst.msk [vmem:[%s954] sm:$0xff] %vm117, %v952
    %v956 = vld [vmem:[#allocation3] sm:$0xff]
    %v957 = vld [vmem:[#allocation3 + $0x8] sm:$0xff]
    %v958 = vld [vmem:[#allocation3 + $0x10] sm:$0xff]
    %v959 = vld [vmem:[#allocation3 + $0x18] sm:$0xff]
    %v960 = vld [vmem:[#allocation3 + $0x20] sm:$0xff]
    %v961 = vld [vmem:[#allocation3 + $0x28] sm:$0xff]
    %v962 = vld [vmem:[#allocation3 + $0x30] sm:$0xff]
    %v963 = vld [vmem:[#allocation3 + $0x38] sm:$0xff]
    %v964 = vld [vmem:[%s4] sm:$0x1]
    %v966 = vlaneseq
    %v967 = vshrl.u32 %v966, 7
    %v968 = vsub.s32 0, %v967
    %v969 = vrot.slane %v964, %v968
    %v971 = vmul.f32 %v956, %v969
    %v972 = vmul.f32 %v957, %v969
    %v973 = vmul.f32 %v958, %v969
    %v974 = vmul.f32 %v959, %v969
    %v975 = vmul.f32 %v960, %v969
    %v976 = vmul.f32 %v961, %v969
    %v977 = vmul.f32 %v962, %v969
    %v978 = vmul.f32 %v963, %v969
    %v979 = vsel %vm117, %v971, 0.0
    %980 = vadd.xlane.f32.xlu0 %v979
    %v981 = vpop.xlane.xlu0 %980
    %v982 = vsel %vm117, %v972, 0.0
    %983 = vadd.xlane.f32.xlu0 %v982
    %v984 = vpop.xlane.xlu0 %983
    %v985 = vsel %vm117, %v973, 0.0
    %986 = vadd.xlane.f32.xlu0 %v985
    %v987 = vpop.xlane.xlu0 %986
    %v988 = vsel %vm117, %v974, 0.0
    %989 = vadd.xlane.f32.xlu0 %v988
    %v990 = vpop.xlane.xlu0 %989
    %v991 = vsel %vm117, %v975, 0.0
    %992 = vadd.xlane.f32.xlu0 %v991
    %v993 = vpop.xlane.xlu0 %992
    %v994 = vsel %vm117, %v976, 0.0
    %995 = vadd.xlane.f32.xlu0 %v994
    %v996 = vpop.xlane.xlu0 %995
    %v997 = vsel %vm117, %v977, 0.0
    %998 = vadd.xlane.f32.xlu0 %v997
    %v999 = vpop.xlane.xlu0 %998
    %v1000 = vsel %vm117, %v978, 0.0
    %1001 = vadd.xlane.f32.xlu0 %v1000
    %v1002 = vpop.xlane.xlu0 %1001
    %v1003 = vld [vmem:[#allocation4] sm:$0x1]
    %v1005 = vlaneseq
    %v1006 = vshrl.u32 %v1005, 7
    %v1007 = vsub.s32 0, %v1006
    %v1008 = vrot.slane %v1003, %v1007
    %1009 = vset.pattern.permute.xlu0 0
    %1010 = vperm.xlu0 %1009, %v1008
    %v1011 = vpop.permute.xlu0 %1010
    %v1013 = vadd.f32 %v981, %v1011
    %v1014 = vadd.f32 %v984, %v1011
    %v1015 = vadd.f32 %v987, %v1011
    %v1016 = vadd.f32 %v990, %v1011
    %v1017 = vadd.f32 %v993, %v1011
    %v1018 = vadd.f32 %v996, %v1011
    %v1019 = vadd.f32 %v999, %v1011
    %v1020 = vadd.f32 %v1002, %v1011
    %v1029 = vlaneseq
    %v1030 = vand.u32 %v1029, 127
    %v1031 = vlaneseq
    %v1032 = vshrl.u32 %v1031, 7
    %v1033 = vsub.s32 %v1030, %v1032
    %v1034 = vrot.slane %v1013, %v1033
    %v1035 = vlaneseq
    %v1036 = vshrl.u32 %v1035, 7
    %v1037 = vsub.s32 %v1030, %v1036
    %v1038 = vrot.slane %v1014, %v1037
    %v1039 = vlaneseq
    %v1040 = vshrl.u32 %v1039, 7
    %v1041 = vsub.s32 %v1030, %v1040
    %v1042 = vrot.slane %v1015, %v1041
    %v1043 = vlaneseq
    %v1044 = vshrl.u32 %v1043, 7
    %v1045 = vsub.s32 %v1030, %v1044
    %v1046 = vrot.slane %v1016, %v1045
    %v1047 = vlaneseq
    %v1048 = vshrl.u32 %v1047, 7
    %v1049 = vsub.s32 %v1030, %v1048
    %v1050 = vrot.slane %v1017, %v1049
    %v1051 = vlaneseq
    %v1052 = vshrl.u32 %v1051, 7
    %v1053 = vsub.s32 %v1030, %v1052
    %v1054 = vrot.slane %v1018, %v1053
    %v1055 = vlaneseq
    %v1056 = vshrl.u32 %v1055, 7
    %v1057 = vsub.s32 %v1030, %v1056
    %v1058 = vrot.slane %v1019, %v1057
    %v1059 = vlaneseq
    %v1060 = vshrl.u32 %v1059, 7
    %v1061 = vsub.s32 %v1030, %v1060
    %v1062 = vrot.slane %v1020, %v1061
    %vm1063 = vcmask 1041409
    %v1064 = vsel %vm1063, %v1038, %v1034
    %vm1065 = vcmask 1042434
    %v1066 = vsel %vm1065, %v1042, %v1064
    %vm1067 = vcmask 1043459
    %v1068 = vsel %vm1067, %v1046, %v1066
    %vm1069 = vcmask 1044484
    %v1070 = vsel %vm1069, %v1050, %v1068
    %vm1071 = vcmask 1045509
    %v1072 = vsel %vm1071, %v1054, %v1070
    %vm1073 = vcmask 1046534
    %v1074 = vsel %vm1073, %v1058, %v1072
    %vm1075 = vcmask 1047559
    %v1076 = vsel %vm1075, %v1062, %v1074
    %vm1078 = vcmask 64512
    %1079 = vst.msk [vmem:[#allocation5] sm:$0xff] %vm1078, %v1076
    // Predicated region
    $region26: #{tpu_custom_call.1} parent=1 // pred_check
      _
    $region27: #{tpu_custom_call.1} parent=1 // pred_check_branch
      %1081 = sbr.rel (0) target = $region29
    $region28: #{tpu_custom_call.1} parent=1 // pred_region
      %s1083 = ssub.s32 128, 128
      %1084 = vsyncadd [#allocation6], %s1083
      %s1086 = sshll.u32 [#allocation5], 4
      %s1087 = int_to_ptr.vmem [resolvable:$true] %s1086
      %1089 = dma.vmem_to_hbm [thread:$0]  %s1087, 128, %s6, [#allocation6]
    $region29: #{tpu_custom_call.1} parent=1 // pred_fallthru
      _
    // Predicated region
    $region30: #{tpu_custom_call.1} parent=1 // pred_check
      _
    $region31: #{tpu_custom_call.1} parent=1 // pred_check_branch
      %1091 = sbr.rel (0) target = $region33
    $region32: #{tpu_custom_call.1} parent=1 // pred_region
      %1092 = dma.done [#allocation6], 128
    $region33: #{tpu_custom_call.1} parent=1 // pred_fallthru
      _
    %1093 = vsyncpa [#allocation6], 1

</llo_original>
